<compile_context>
chip_gen: v7x
topology: tpu7x:2x2x1
jax: 0.10.0
libtpu: 0.0.40
codegen_flags: <defaults>
</compile_context>

<pallas_src>
import functools

import jax
import jax.numpy as jnp
from jax import lax
from jax.experimental import pallas as pl
from jax.experimental.pallas import tpu as pltpu


OBS_DIM = 157        # observation_space length (1 + 3*52)
OBS_PAD = 256        # zero-padded obs dim (dense MXU K)
ACT_DIM = 52         # action_space
H1, H2, H3 = 128, 256, 128
HEAD_PAD = 128       # fused action(52) + value(1) head, padded lane-dense


def _policy_kernel(x_ref,
                   w1_ref, b1_ref,
                   w2_ref, b2_ref,
                   w3_ref, b3_ref,
                   wh_ref, bh_ref,
                   out_ref):
    """One batch tile: fused 3-layer MLP -> fused (action | value) head.

    Output tile is lane-dense (TB, 128):
      lanes [0, 52)   : softmax(action logits)
      lane  52        : state value
      lanes (52, 128) : exactly zero (zero-padded head weights/bias)
    """
    x = x_ref[...]

    h = jnp.dot(x, w1_ref[...], preferred_element_type=jnp.float32) + b1_ref[...]
    h = jnp.maximum(h, 0.0)
    h = jnp.dot(h, w2_ref[...], preferred_element_type=jnp.float32) + b2_ref[...]
    h = jnp.maximum(h, 0.0)
    h = jnp.dot(h, w3_ref[...], preferred_element_type=jnp.float32) + b3_ref[...]
    h = jnp.maximum(h, 0.0)

    # One MXU pass for both heads: cols [0,52) = action logits, col 52 = value,
    # cols (52,128) are zero-padded -> 0.
    head = jnp.dot(h, wh_ref[...], preferred_element_type=jnp.float32) + bh_ref[...]

    lane = lax.broadcasted_iota(jnp.int32, head.shape, 1)
    is_act = lane < ACT_DIM

    # Stabilized softmax over the 52 action lanes only (matches torch dim=1 max).
    logits = jnp.where(is_act, head, -jnp.inf)
    m = jnp.max(logits, axis=-1, keepdims=True)
    e = jnp.exp(logits - m)                       # exp(-inf) = 0 outside actions
    denom = jnp.sum(e, axis=-1, keepdims=True)
    # Exact reciprocal (approx=True would break the 1e-5 parity check).
    probs = e * pl.reciprocal(denom, approx=False)

    # Pack: probs in lanes 0..51, value in lane 52, zeros elsewhere.
    out_ref[...] = probs + jnp.where(lane == ACT_DIM, head, 0.0)


def _round_up(n, m):
    return (n + m - 1) // m * m


def prepare_params(params):
    """Pad / fuse PyTorch-layout params into the kernel layout (done once)."""
    w1p = jnp.zeros((OBS_PAD, H1), jnp.float32).at[:OBS_DIM].set(params["w1"])
    wh = jnp.zeros((H3, HEAD_PAD), jnp.float32)
    wh = wh.at[:, :ACT_DIM].set(params["wa"])
    wh = wh.at[:, ACT_DIM:ACT_DIM + 1].set(params["wv"])
    bh = jnp.zeros((1, HEAD_PAD), jnp.float32)
    bh = bh.at[:, :ACT_DIM].set(params["ba"])
    bh = bh.at[:, ACT_DIM:ACT_DIM + 1].set(params["bv"])
    return dict(w1=w1p, b1=params["b1"], w2=params["w2"], b2=params["b2"],
                w3=params["w3"], b3=params["b3"], wh=wh, bh=bh)


@functools.partial(jax.jit, static_argnames=("block_b",))
def policy_network_forward(x, kparams, *, block_b=512):
    """x: (B, 157) float32. kparams: output of prepare_params()."""
    B = x.shape[0]
    TB = min(block_b, _round_up(B, 8))       # batch tile (sublane-aligned)
    Bp = _round_up(B, TB)

    # Zero-pad obs dim 157 -> 256 and batch -> multiple of TB (wrapper-side).
    xp = jnp.zeros((Bp, OBS_PAD), jnp.float32).at[:B, :OBS_DIM].set(
        x.astype(jnp.float32))

    grid = (Bp // TB,)

    def resident(shape):
        # constant index_map -> weight/bias DMA'd once, stays VMEM-resident
        return pl.BlockSpec(shape, lambda i: (0, 0))

    flops = 2 * Bp * (OBS_PAD * H1 + H1 * H2 + H2 * H3 + H3 * HEAD_PAD)
    bytes_accessed = 4 * (Bp * OBS_PAD + Bp * HEAD_PAD
                          + OBS_PAD * H1 + H1 * H2 + H2 * H3 + H3 * HEAD_PAD
                          + H1 + H2 + H3 + HEAD_PAD)

    out = pl.pallas_call(
        _policy_kernel,
        out_shape=jax.ShapeDtypeStruct((Bp, HEAD_PAD), jnp.float32),
        grid_spec=pltpu.PrefetchScalarGridSpec(
            num_scalar_prefetch=0,
            grid=grid,
            in_specs=[
                pl.BlockSpec((TB, OBS_PAD), lambda i: (i, 0)),   # x tile
                resident((OBS_PAD, H1)), resident((1, H1)),
                resident((H1, H2)), resident((1, H2)),
                resident((H2, H3)), resident((1, H3)),
                resident((H3, HEAD_PAD)), resident((1, HEAD_PAD)),
            ],
            out_specs=pl.BlockSpec((TB, HEAD_PAD), lambda i: (i, 0)),
        ),
        compiler_params=pltpu.CompilerParams(
            dimension_semantics=("parallel",),      # shard batch tiles across TCs (v7x)
            vmem_limit_bytes=32 * 1024 * 1024,      # safe on v5e/v6e/v7x
        ),
        cost_estimate=pl.CostEstimate(
            flops=flops,
            transcendentals=Bp * HEAD_PAD,
            bytes_accessed=bytes_accessed),
    )(xp,
      kparams["w1"], kparams["b1"],
      kparams["w2"], kparams["b2"],
      kparams["w3"], kparams["b3"],
      kparams["wh"], kparams["bh"])

    probs = out[:B, :ACT_DIM]
    values = out[:B, ACT_DIM:ACT_DIM + 1]
    return probs, values


def _linear_init(key, fan_in, fan_out):
    """Deterministic init mimicking PyTorch nn.Linear default:
    U(-1/sqrt(fan_in), 1/sqrt(fan_in)) for weight and bias.
    Weight stored as (fan_in, fan_out) (transposed vs. torch)."""
    kw, kb = jax.random.split(key)
    bound = 1.0 / jnp.sqrt(jnp.float32(fan_in))
    w = jax.random.uniform(kw, (fan_in, fan_out), jnp.float32, -bound, bound)
    b = jax.random.uniform(kb, (1, fan_out), jnp.float32, -bound, bound)
    return w, b


def init_params(key):
    keys = jax.random.split(key, 5)
    w1, b1 = _linear_init(keys[0], OBS_DIM, H1)
    w2, b2 = _linear_init(keys[1], H1, H2)
    w3, b3 = _linear_init(keys[2], H2, H3)
    wa, ba = _linear_init(keys[3], H3, ACT_DIM)
    wv, bv = _linear_init(keys[4], H3, 1)
    return dict(w1=w1, b1=b1, w2=w2, b2=b2, w3=w3, b3=b3,
                wa=wa, ba=ba, wv=wv, bv=bv)


def _reference_forward(x, p):
    """Pure-JAX reference (PyTorch layout params) for correctness checking."""
    h = jnp.maximum(x @ p["w1"] + p["b1"], 0.0)
    h = jnp.maximum(h @ p["w2"] + p["b2"], 0.0)
    h = jnp.maximum(h @ p["w3"] + p["b3"], 0.0)
    logits = h @ p["wa"] + p["ba"]
    logits = logits - jnp.max(logits, axis=1, keepdims=True)
    probs = jax.nn.softmax(logits, axis=-1)
    values = h @ p["wv"] + p["bv"]
    return probs, values


if __name__ == "__main__":
    key = jax.random.PRNGKey(0)
    kp, kx = jax.random.split(key)

    params = init_params(kp)
    kparams = prepare_params(params)

    # Small batch of card-game observations (values in [0, 1] like the env's
    # normalized round + one-hot card encodings).
    B = 8
    x = jax.random.uniform(kx, (B, OBS_DIM), jnp.float32, 0.0, 1.0)

    probs, values = policy_network_forward(x, kparams)
    jax.block_until_ready((probs, values))

    # Sanity check against the pure-JAX reference.
    ref_probs, ref_values = _reference_forward(x, params)
    assert probs.shape == (B, ACT_DIM) and values.shape == (B, 1)
    assert jnp.allclose(probs, ref_probs, atol=1e-5, rtol=1e-5)
    assert jnp.allclose(values, ref_values, atol=1e-5, rtol=1e-5)
    assert jnp.allclose(jnp.sum(probs, axis=-1), 1.0, atol=1e-5)

    print("KERNEL_OK")
</pallas_src>

<mosaic_0001>
module attributes {stable_mosaic.version = 11 : i64} {
  func.func @_policy_kernel(%arg0: i32, %arg1: memref<8x256xf32, #tpu.memory_space<vmem>>, %arg2: memref<256x128xf32, #tpu.memory_space<vmem>>, %arg3: memref<1x128xf32, #tpu.memory_space<vmem>>, %arg4: memref<128x256xf32, #tpu.memory_space<vmem>>, %arg5: memref<1x256xf32, #tpu.memory_space<vmem>>, %arg6: memref<256x128xf32, #tpu.memory_space<vmem>>, %arg7: memref<1x128xf32, #tpu.memory_space<vmem>>, %arg8: memref<128x128xf32, #tpu.memory_space<vmem>>, %arg9: memref<1x128xf32, #tpu.memory_space<vmem>>, %arg10: memref<8x128xf32, #tpu.memory_space<vmem>>) attributes {dimension_semantics = [#tpu.dimension_semantics<parallel>], iteration_bounds = array<i64: 1>, scalar_prefetch = 0 : i64, scratch_operands = 0 : i64, tpu.core_type = #tpu.core_type<tc>, window_params = [{transform_indices = @transform_0, window_bounds = array<i64: 8, 256>}, {pipeline_mode = #tpu.pipeline_mode<synchronous>, transform_indices = @transform_1, window_bounds = array<i64: 256, 128>}, {pipeline_mode = #tpu.pipeline_mode<synchronous>, transform_indices = @transform_2, window_bounds = array<i64: 1, 128>}, {pipeline_mode = #tpu.pipeline_mode<synchronous>, transform_indices = @transform_3, window_bounds = array<i64: 128, 256>}, {pipeline_mode = #tpu.pipeline_mode<synchronous>, transform_indices = @transform_4, window_bounds = array<i64: 1, 256>}, {pipeline_mode = #tpu.pipeline_mode<synchronous>, transform_indices = @transform_5, window_bounds = array<i64: 256, 128>}, {pipeline_mode = #tpu.pipeline_mode<synchronous>, transform_indices = @transform_6, window_bounds = array<i64: 1, 128>}, {pipeline_mode = #tpu.pipeline_mode<synchronous>, transform_indices = @transform_7, window_bounds = array<i64: 128, 128>}, {pipeline_mode = #tpu.pipeline_mode<synchronous>, transform_indices = @transform_8, window_bounds = array<i64: 1, 128>}, {transform_indices = @transform_9, window_bounds = array<i64: 8, 128>}]} {
    %c0 = arith.constant 0 : index
    %c0_0 = arith.constant 0 : index
    %0 = vector.load %arg1[%c0, %c0_0] : memref<8x256xf32, #tpu.memory_space<vmem>>, vector<8x256xf32>
    %c0_1 = arith.constant 0 : index
    %c0_2 = arith.constant 0 : index
    %1 = vector.load %arg2[%c0_1, %c0_2] : memref<256x128xf32, #tpu.memory_space<vmem>>, vector<256x128xf32>
    %cst = arith.constant dense<0.000000e+00> : vector<8x128xf32>
    %2 = tpu.matmul %0, %1, %cst {dimension_numbers = #tpu.dot_dimension_numbers<[1], [0], [0], [1], [0, 0, 1, 1], [], []>} : vector<8x256xf32>, vector<256x128xf32>, vector<8x128xf32> -> vector<8x128xf32>
    %c0_3 = arith.constant 0 : index
    %c0_4 = arith.constant 0 : index
    %3 = vector.load %arg3[%c0_3, %c0_4] : memref<1x128xf32, #tpu.memory_space<vmem>>, vector<1x128xf32>
    %4 = vector.broadcast %3 : vector<1x128xf32> to vector<8x128xf32>
    %5 = arith.addf %2, %4 : vector<8x128xf32>
    %cst_5 = arith.constant 0.000000e+00 : f32
    %6 = vector.broadcast %cst_5 : f32 to vector<8x128xf32>
    %7 = arith.maximumf %5, %6 : vector<8x128xf32>
    %c0_6 = arith.constant 0 : index
    %c0_7 = arith.constant 0 : index
    %8 = vector.load %arg4[%c0_6, %c0_7] : memref<128x256xf32, #tpu.memory_space<vmem>>, vector<128x256xf32>
    %cst_8 = arith.constant dense<0.000000e+00> : vector<8x256xf32>
    %9 = tpu.matmul %7, %8, %cst_8 {dimension_numbers = #tpu.dot_dimension_numbers<[1], [0], [0], [1], [0, 0, 1, 1], [], []>} : vector<8x128xf32>, vector<128x256xf32>, vector<8x256xf32> -> vector<8x256xf32>
    %c0_9 = arith.constant 0 : index
    %c0_10 = arith.constant 0 : index
    %10 = vector.load %arg5[%c0_9, %c0_10] : memref<1x256xf32, #tpu.memory_space<vmem>>, vector<1x256xf32>
    %11 = vector.broadcast %10 : vector<1x256xf32> to vector<8x256xf32>
    %12 = arith.addf %9, %11 : vector<8x256xf32>
    %cst_11 = arith.constant 0.000000e+00 : f32
    %13 = vector.broadcast %cst_11 : f32 to vector<8x256xf32>
    %14 = arith.maximumf %12, %13 : vector<8x256xf32>
    %c0_12 = arith.constant 0 : index
    %c0_13 = arith.constant 0 : index
    %15 = vector.load %arg6[%c0_12, %c0_13] : memref<256x128xf32, #tpu.memory_space<vmem>>, vector<256x128xf32>
    %cst_14 = arith.constant dense<0.000000e+00> : vector<8x128xf32>
    %16 = tpu.matmul %14, %15, %cst_14 {dimension_numbers = #tpu.dot_dimension_numbers<[1], [0], [0], [1], [0, 0, 1, 1], [], []>} : vector<8x256xf32>, vector<256x128xf32>, vector<8x128xf32> -> vector<8x128xf32>
    %c0_15 = arith.constant 0 : index
    %c0_16 = arith.constant 0 : index
    %17 = vector.load %arg7[%c0_15, %c0_16] : memref<1x128xf32, #tpu.memory_space<vmem>>, vector<1x128xf32>
    %18 = vector.broadcast %17 : vector<1x128xf32> to vector<8x128xf32>
    %19 = arith.addf %16, %18 : vector<8x128xf32>
    %cst_17 = arith.constant 0.000000e+00 : f32
    %20 = vector.broadcast %cst_17 : f32 to vector<8x128xf32>
    %21 = arith.maximumf %19, %20 : vector<8x128xf32>
    %c0_18 = arith.constant 0 : index
    %c0_19 = arith.constant 0 : index
    %22 = vector.load %arg8[%c0_18, %c0_19] : memref<128x128xf32, #tpu.memory_space<vmem>>, vector<128x128xf32>
    %cst_20 = arith.constant dense<0.000000e+00> : vector<8x128xf32>
    %23 = tpu.matmul %21, %22, %cst_20 {dimension_numbers = #tpu.dot_dimension_numbers<[1], [0], [0], [1], [0, 0, 1, 1], [], []>} : vector<8x128xf32>, vector<128x128xf32>, vector<8x128xf32> -> vector<8x128xf32>
    %c0_21 = arith.constant 0 : index
    %c0_22 = arith.constant 0 : index
    %24 = vector.load %arg9[%c0_21, %c0_22] : memref<1x128xf32, #tpu.memory_space<vmem>>, vector<1x128xf32>
    %25 = vector.broadcast %24 : vector<1x128xf32> to vector<8x128xf32>
    %26 = arith.addf %23, %25 : vector<8x128xf32>
    %27 = tpu.iota {dimensions = array<i32: 1>} : vector<8x128xi32>
    %c52_i32 = arith.constant 52 : i32
    %28 = vector.broadcast %c52_i32 : i32 to vector<8x128xi32>
    %29 = arith.cmpi slt, %27, %28 : vector<8x128xi32>
    %cst_23 = arith.constant 0xFF800000 : f32
    %30 = vector.broadcast %cst_23 : f32 to vector<8x128xf32>
    %31 = arith.select %29, %26, %30 : vector<8x128xi1>, vector<8x128xf32>
    %cst_24 = arith.constant dense<0xFF800000> : vector<8xf32>
    %32 = vector.multi_reduction <maximumf>, %31, %cst_24 [1] : vector<8x128xf32> to vector<8xf32>
    %33 = vector.shape_cast %32 : vector<8xf32> to vector<8x1xf32>
    %34 = vector.broadcast %33 : vector<8x1xf32> to vector<8x128xf32>
    %35 = arith.subf %31, %34 : vector<8x128xf32>
    %36 = math.exp %35 : vector<8x128xf32>
    %cst_25 = arith.constant dense<0.000000e+00> : vector<8xf32>
    %37 = vector.multi_reduction <add>, %36, %cst_25 [1] : vector<8x128xf32> to vector<8xf32>
    %38 = vector.shape_cast %37 : vector<8xf32> to vector<8x1xf32>
    %39 = tpu.reciprocal %38 : vector<8x1xf32> -> vector<8x1xf32>
    %40 = vector.broadcast %39 : vector<8x1xf32> to vector<8x128xf32>
    %41 = arith.mulf %36, %40 : vector<8x128xf32>
    %c52_i32_26 = arith.constant 52 : i32
    %42 = vector.broadcast %c52_i32_26 : i32 to vector<8x128xi32>
    %43 = arith.cmpi eq, %27, %42 : vector<8x128xi32>
    %cst_27 = arith.constant 0.000000e+00 : f32
    %44 = vector.broadcast %cst_27 : f32 to vector<8x128xf32>
    %45 = arith.select %43, %26, %44 : vector<8x128xi1>, vector<8x128xf32>
    %46 = arith.addf %41, %45 : vector<8x128xf32>
    %c0_28 = arith.constant 0 : index
    %c0_29 = arith.constant 0 : index
    %47 = vector.load %arg10[%c0_28, %c0_29] : memref<8x128xf32, #tpu.memory_space<vmem>>, vector<8x128xf32>
    tpu.vector_store %arg10[%c0_28, %c0_29], %46 {strides = array<i32>} : memref<8x128xf32, #tpu.memory_space<vmem>>, vector<8x128xf32>,
    return
  }
  func.func @transform_0(%arg0: i32) -> (i32, i32) {
    %c0_i32 = arith.constant 0 : i32
    %c0_i32_0 = arith.constant 0 : i32
    return %arg0, %c0_i32 : i32, i32
  }
  func.func @transform_1(%arg0: i32) -> (i32, i32) {
    %c0_i32 = arith.constant 0 : i32
    %c0_i32_0 = arith.constant 0 : i32
    %c0_i32_1 = arith.constant 0 : i32
    return %c0_i32, %c0_i32_0 : i32, i32
  }
  func.func @transform_2(%arg0: i32) -> (i32, i32) {
    %c0_i32 = arith.constant 0 : i32
    %c0_i32_0 = arith.constant 0 : i32
    %c0_i32_1 = arith.constant 0 : i32
    return %c0_i32, %c0_i32_0 : i32, i32
  }
  func.func @transform_3(%arg0: i32) -> (i32, i32) {
    %c0_i32 = arith.constant 0 : i32
    %c0_i32_0 = arith.constant 0 : i32
    %c0_i32_1 = arith.constant 0 : i32
    return %c0_i32, %c0_i32_0 : i32, i32
  }
  func.func @transform_4(%arg0: i32) -> (i32, i32) {
    %c0_i32 = arith.constant 0 : i32
    %c0_i32_0 = arith.constant 0 : i32
    %c0_i32_1 = arith.constant 0 : i32
    return %c0_i32, %c0_i32_0 : i32, i32
  }
  func.func @transform_5(%arg0: i32) -> (i32, i32) {
    %c0_i32 = arith.constant 0 : i32
    %c0_i32_0 = arith.constant 0 : i32
    %c0_i32_1 = arith.constant 0 : i32
    return %c0_i32, %c0_i32_0 : i32, i32
  }
  func.func @transform_6(%arg0: i32) -> (i32, i32) {
    %c0_i32 = arith.constant 0 : i32
    %c0_i32_0 = arith.constant 0 : i32
    %c0_i32_1 = arith.constant 0 : i32
    return %c0_i32, %c0_i32_0 : i32, i32
  }
  func.func @transform_7(%arg0: i32) -> (i32, i32) {
    %c0_i32 = arith.constant 0 : i32
    %c0_i32_0 = arith.constant 0 : i32
    %c0_i32_1 = arith.constant 0 : i32
    return %c0_i32, %c0_i32_0 : i32, i32
  }
  func.func @transform_8(%arg0: i32) -> (i32, i32) {
    %c0_i32 = arith.constant 0 : i32
    %c0_i32_0 = arith.constant 0 : i32
    %c0_i32_1 = arith.constant 0 : i32
    return %c0_i32, %c0_i32_0 : i32, i32
  }
  func.func @transform_9(%arg0: i32) -> (i32, i32) {
    %c0_i32 = arith.constant 0 : i32
    %c0_i32_0 = arith.constant 0 : i32
    return %arg0, %c0_i32 : i32, i32
  }
}

</mosaic_0001>

<llo_original>
// kernel: policy_network_forward.1
$region0: #{policy_network_forward.1}
  #allocation0 [shape = 'u32[]', space=smem, size = 0x4, offset = 0x4, fixed_abs, tag = 'smem constant byte address 0x4 - core index']
  #allocation1 [shape = 'u32[144,128]{1,0:T(1,128)}', space=vmem, size = 0x12000, scoped, tag = 'internal scratch']
  %s0 = inlined_call_operand.vmem [shape: f32[8,256], index: 0, kind: input, shape index: {}]
  %s1 = inlined_call_operand.hbm [shape: f32[256,128], index: 1, kind: input, shape index: {}]
  %s2 = inlined_call_operand.vmem [shape: f32[1,128], index: 2, kind: input, shape index: {}]
  %s3 = inlined_call_operand.hbm [shape: f32[128,256], index: 3, kind: input, shape index: {}]
  %s4 = inlined_call_operand.vmem [shape: f32[1,256], index: 4, kind: input, shape index: {}]
  %s5 = inlined_call_operand.hbm [shape: f32[256,128], index: 5, kind: input, shape index: {}]
  %s6 = inlined_call_operand.vmem [shape: f32[1,128], index: 6, kind: input, shape index: {}]
  %s7 = inlined_call_operand.hbm [shape: f32[128,128], index: 7, kind: input, shape index: {}]
  %s8 = inlined_call_operand.vmem [shape: f32[1,128], index: 8, kind: input, shape index: {}]
  %s9 = inlined_call_operand.vmem [shape: f32[8,128], index: 9, kind: output, shape index: {}]
  %s10 = sld [smem:[#allocation0]]
  $region62: #{policy_network_forward.1} parent=0
    _
  %s12 = ssub.s32 1, %s10
  %s13 = scalar_select 0, %s12, %s10
  $region1: #{policy_network_forward.1} parent=0
    #allocation2 [shape = 'u8[131072]{0}', space=vmem, size = 0x20000, scoped, tag = 'input window, operand 1, single buffered']
    #allocation3 [shape = 's32[1]{0}', space=sflag, size = 0x4, scoped, tag = 'scoped memory for policy_network_forward.1']
    #allocation4 [shape = 'u8[131072]{0}', space=vmem, size = 0x20000, scoped, tag = 'input window, operand 3, single buffered']
    #allocation5 [shape = 's32[1]{0}', space=sflag, size = 0x4, scoped, tag = 'scoped memory for policy_network_forward.1']
    #allocation6 [shape = 'u8[131072]{0}', space=vmem, size = 0x20000, scoped, tag = 'input window, operand 5, single buffered']
    #allocation7 [shape = 'u8[65536]{0}', space=vmem, size = 0x10000, scoped, tag = 'input window, operand 7, single buffered']
    #allocation8 [shape = 's32[1]{0}', space=sflag, size = 0x4, scoped, tag = 'scoped memory for policy_network_forward.1']
    %14 = vsyncpa [#allocation3], 0
    %15 = vsyncpa [#allocation5], 0
    %16 = vsyncpa [#allocation8], 0
    // Predicated region
    $region2: #{policy_network_forward.1} parent=1 // pred_check
      _
    $region3: #{policy_network_forward.1} parent=1 // pred_check_branch
      %18 = sbr.rel (0) target = $region5
    $region4: #{policy_network_forward.1} parent=1 // pred_region
      _
    $region5: #{policy_network_forward.1} parent=1 // pred_fallthru
      _
    // Predicated region
    $region6: #{policy_network_forward.1} parent=1 // pred_check
      _
    $region7: #{policy_network_forward.1} parent=1 // pred_check_branch
      %20 = sbr.rel (0) target = $region9
    $region8: #{policy_network_forward.1} parent=1 // pred_region
      %s22 = ssub.s32 4096, 4096
      %23 = vsyncadd [#allocation3], %s22
      %s24 = sshll.u32 [#allocation2], 4
      %s25 = int_to_ptr.vmem [resolvable:$true] %s24
      %30 = dma.hbm_to_vmem [thread:$0]  %s1, 4096, %s25, [#allocation3], 128, 128, 8
    $region9: #{policy_network_forward.1} parent=1 // pred_fallthru
      _
    // Predicated region
    $region10: #{policy_network_forward.1} parent=1 // pred_check
      _
    $region11: #{policy_network_forward.1} parent=1 // pred_check_branch
      %32 = sbr.rel (0) target = $region13
    $region12: #{policy_network_forward.1} parent=1 // pred_region
      _
    $region13: #{policy_network_forward.1} parent=1 // pred_fallthru
      _
    // Predicated region
    $region14: #{policy_network_forward.1} parent=1 // pred_check
      _
    $region15: #{policy_network_forward.1} parent=1 // pred_check_branch
      %34 = sbr.rel (0) target = $region17
    $region16: #{policy_network_forward.1} parent=1 // pred_region
      %s36 = ssub.s32 4096, 4096
      %37 = vsyncadd [#allocation5], %s36
      %s38 = sshll.u32 [#allocation4], 4
      %s39 = int_to_ptr.vmem [resolvable:$true] %s38
      %44 = dma.hbm_to_vmem [thread:$0]  %s3, 4096, %s39, [#allocation5], 256, 256, 16
    $region17: #{policy_network_forward.1} parent=1 // pred_fallthru
      _
    // Predicated region
    $region18: #{policy_network_forward.1} parent=1 // pred_check
      _
    $region19: #{policy_network_forward.1} parent=1 // pred_check_branch
      %46 = sbr.rel (0) target = $region21
    $region20: #{policy_network_forward.1} parent=1 // pred_region
      _
    $region21: #{policy_network_forward.1} parent=1 // pred_fallthru
      _
    // Predicated region
    $region22: #{policy_network_forward.1} parent=1 // pred_check
      _
    $region23: #{policy_network_forward.1} parent=1 // pred_check_branch
      %48 = sbr.rel (0) target = $region25
    $region24: #{policy_network_forward.1} parent=1 // pred_region
      %s50 = ssub.s32 4096, 4096
      %51 = vsyncadd [#allocation5], %s50
      %s52 = sshll.u32 [#allocation6], 4
      %s53 = int_to_ptr.vmem [resolvable:$true] %s52
      %58 = dma.hbm_to_vmem [thread:$0]  %s5, 4096, %s53, [#allocation5], 128, 128, 8
    $region25: #{policy_network_forward.1} parent=1 // pred_fallthru
      _
    // Predicated region
    $region26: #{policy_network_forward.1} parent=1 // pred_check
      _
    $region27: #{policy_network_forward.1} parent=1 // pred_check_branch
      %60 = sbr.rel (0) target = $region29
    $region28: #{policy_network_forward.1} parent=1 // pred_region
      _
    $region29: #{policy_network_forward.1} parent=1 // pred_fallthru
      _
    // Predicated region
    $region30: #{policy_network_forward.1} parent=1 // pred_check
      _
    $region31: #{policy_network_forward.1} parent=1 // pred_check_branch
      %62 = sbr.rel (0) target = $region33
    $region32: #{policy_network_forward.1} parent=1 // pred_region
      %s64 = ssub.s32 2048, 2048
      %65 = vsyncadd [#allocation8], %s64
      %s66 = sshll.u32 [#allocation7], 4
      %s67 = int_to_ptr.vmem [resolvable:$true] %s66
      %72 = dma.hbm_to_vmem [thread:$0]  %s7, 2048, %s67, [#allocation8], 128, 128, 8
    $region33: #{policy_network_forward.1} parent=1 // pred_fallthru
      _
    // Predicated region
    $region34: #{policy_network_forward.1} parent=1 // pred_check
      _
    $region35: #{policy_network_forward.1} parent=1 // pred_check_branch
      %74 = sbr.rel (0) target = $region37
    $region36: #{policy_network_forward.1} parent=1 // pred_region
      _
    $region37: #{policy_network_forward.1} parent=1 // pred_fallthru
      _
    // Predicated region
    $region38: #{policy_network_forward.1} parent=1 // pred_check
      _
    $region39: #{policy_network_forward.1} parent=1 // pred_check_branch
      %76 = sbr.rel (0) target = $region41
    $region40: #{policy_network_forward.1} parent=1 // pred_region
      %77 = dma.done [#allocation3], 4096
    $region41: #{policy_network_forward.1} parent=1 // pred_fallthru
      _
    // Predicated region
    $region42: #{policy_network_forward.1} parent=1 // pred_check
      _
    $region43: #{policy_network_forward.1} parent=1 // pred_check_branch
      %79 = sbr.rel (0) target = $region45
    $region44: #{policy_network_forward.1} parent=1 // pred_region
      %80 = dma.done [#allocation5], 4096
    $region45: #{policy_network_forward.1} parent=1 // pred_fallthru
      _
    // Predicated region
    $region46: #{policy_network_forward.1} parent=1 // pred_check
      _
    $region47: #{policy_network_forward.1} parent=1 // pred_check_branch
      %82 = sbr.rel (0) target = $region49
    $region48: #{policy_network_forward.1} parent=1 // pred_region
      %83 = dma.done [#allocation5], 4096
    $region49: #{policy_network_forward.1} parent=1 // pred_fallthru
      _
    // Predicated region
    $region50: #{policy_network_forward.1} parent=1 // pred_check
      _
    $region51: #{policy_network_forward.1} parent=1 // pred_check_branch
      %85 = sbr.rel (0) target = $region53
    $region52: #{policy_network_forward.1} parent=1 // pred_region
      %86 = dma.done [#allocation8], 2048
    $region53: #{policy_network_forward.1} parent=1 // pred_fallthru
      _
    %v87 = vld [vmem:[%s0] sm:$0xff]
    %v88 = vld [vmem:[%s0 + $0x8] sm:$0xff]
    %v89 = vld [vmem:[#allocation2] sm:$0xff]
    %v90 = vld [vmem:[#allocation2 + $0x8] sm:$0xff]
    %v91 = vld [vmem:[#allocation2 + $0x10] sm:$0xff]
    %v92 = vld [vmem:[#allocation2 + $0x18] sm:$0xff]
    %v93 = vld [vmem:[#allocation2 + $0x20] sm:$0xff]
    %v94 = vld [vmem:[#allocation2 + $0x28] sm:$0xff]
    %v95 = vld [vmem:[#allocation2 + $0x30] sm:$0xff]
    %v96 = vld [vmem:[#allocation2 + $0x38] sm:$0xff]
    %v97 = vld [vmem:[#allocation2 + $0x40] sm:$0xff]
    %v98 = vld [vmem:[#allocation2 + $0x48] sm:$0xff]
    %v99 = vld [vmem:[#allocation2 + $0x50] sm:$0xff]
    %v100 = vld [vmem:[#allocation2 + $0x58] sm:$0xff]
    %v101 = vld [vmem:[#allocation2 + $0x60] sm:$0xff]
    %v102 = vld [vmem:[#allocation2 + $0x68] sm:$0xff]
    %v103 = vld [vmem:[#allocation2 + $0x70] sm:$0xff]
    %v104 = vld [vmem:[#allocation2 + $0x78] sm:$0xff]
    %v105 = vld [vmem:[#allocation2 + $0x80] sm:$0xff]
    %v106 = vld [vmem:[#allocation2 + $0x88] sm:$0xff]
    %v107 = vld [vmem:[#allocation2 + $0x90] sm:$0xff]
    %v108 = vld [vmem:[#allocation2 + $0x98] sm:$0xff]
    %v109 = vld [vmem:[#allocation2 + $0xa0] sm:$0xff]
    %v110 = vld [vmem:[#allocation2 + $0xa8] sm:$0xff]
    %v111 = vld [vmem:[#allocation2 + $0xb0] sm:$0xff]
    %v112 = vld [vmem:[#allocation2 + $0xb8] sm:$0xff]
    %v113 = vld [vmem:[#allocation2 + $0xc0] sm:$0xff]
    %v114 = vld [vmem:[#allocation2 + $0xc8] sm:$0xff]
    %v115 = vld [vmem:[#allocation2 + $0xd0] sm:$0xff]
    %v116 = vld [vmem:[#allocation2 + $0xd8] sm:$0xff]
    %v117 = vld [vmem:[#allocation2 + $0xe0] sm:$0xff]
    %v118 = vld [vmem:[#allocation2 + $0xe8] sm:$0xff]
    %v119 = vld [vmem:[#allocation2 + $0xf0] sm:$0xff]
    %v120 = vld [vmem:[#allocation2 + $0xf8] sm:$0xff]
    %v121 = vld [vmem:[%s2] sm:$0x1]
    %v123 = vlaneseq
    %v124 = vshrl.u32 %v123, 7
    %v125 = vsub.s32 0, %v124
    %v126 = vrot.slane %v121, %v125
    %128 = vmatprep.subr.mxu0 0.0
    %129 = vmatpush1.msra.mxu0 %v89
    %130 = vmatprep.subr.mxu0 0.0
    %131 = vmatpush1.msra.mxu0 %v90
    %132 = vmatprep.subr.mxu0 0.0
    %133 = vmatpush1.msra.mxu0 %v91
    %134 = vmatprep.subr.mxu0 0.0
    %135 = vmatpush1.msra.mxu0 %v92
    %136 = vmatprep.subr.mxu0 0.0
    %137 = vmatpush1.msra.mxu0 %v93
    %138 = vmatprep.subr.mxu0 0.0
    %139 = vmatpush1.msra.mxu0 %v94
    %140 = vmatprep.subr.mxu0 0.0
    %141 = vmatpush1.msra.mxu0 %v95
    %142 = vmatprep.subr.mxu0 0.0
    %143 = vmatpush1.msra.mxu0 %v96
    %144 = vmatprep.subr.mxu0 0.0
    %145 = vmatpush1.msra.mxu0 %v97
    %146 = vmatprep.subr.mxu0 0.0
    %147 = vmatpush1.msra.mxu0 %v98
    %148 = vmatprep.subr.mxu0 0.0
    %149 = vmatpush1.msra.mxu0 %v99
    %150 = vmatprep.subr.mxu0 0.0
    %151 = vmatpush1.msra.mxu0 %v100
    %152 = vmatprep.subr.mxu0 0.0
    %153 = vmatpush1.msra.mxu0 %v101
    %154 = vmatprep.subr.mxu0 0.0
    %155 = vmatpush1.msra.mxu0 %v102
    %156 = vmatprep.subr.mxu0 0.0
    %157 = vmatpush1.msra.mxu0 %v103
    %158 = vmatprep.subr.mxu0 0.0
    %159 = vmatpush1.msra.mxu0 %v104
    %160 = vmatprep.subr.mxu0 0.0
    %161 = vmatpush1.msra.mxu0 %v105
    %162 = vmatprep.subr.mxu0 0.0
    %163 = vmatpush1.msra.mxu0 %v106
    %164 = vmatprep.subr.mxu0 0.0
    %165 = vmatpush1.msra.mxu0 %v107
    %166 = vmatprep.subr.mxu0 0.0
    %167 = vmatpush1.msra.mxu0 %v108
    %168 = vmatprep.subr.mxu0 0.0
    %169 = vmatpush1.msra.mxu0 %v109
    %170 = vmatprep.subr.mxu0 0.0
    %171 = vmatpush1.msra.mxu0 %v110
    %172 = vmatprep.subr.mxu0 0.0
    %173 = vmatpush1.msra.mxu0 %v111
    %174 = vmatprep.subr.mxu0 0.0
    %175 = vmatpush1.msra.mxu0 %v112
    %176 = vmatprep.subr.mxu0 0.0
    %177 = vmatpush1.msra.mxu0 %v113
    %178 = vmatprep.subr.mxu0 0.0
    %179 = vmatpush1.msra.mxu0 %v114
    %180 = vmatprep.subr.mxu0 0.0
    %181 = vmatpush1.msra.mxu0 %v115
    %182 = vmatprep.subr.mxu0 0.0
    %183 = vmatpush1.msra.mxu0 %v116
    %184 = vmatprep.subr.mxu0 0.0
    %185 = vmatpush1.msra.mxu0 %v117
    %186 = vmatprep.subr.mxu0 0.0
    %187 = vmatpush1.msra.mxu0 %v118
    %188 = vmatprep.subr.mxu0 0.0
    %189 = vmatpush1.msra.mxu0 %v119
    %190 = vmatprep.subr.mxu0 0.0
    %191 = vmatpush1.msra.mxu0 %v120
    %192 = vmatprep.mubr.f32.mxu0 %v88
    %193 = vmatmul.mubr.f32.gmra.mrb[0].mxu0 %v87
    %v194 = vpop.f32.mrb[0].mxu0
    %v195 = vadd.f32 %v126, %v194
    %v196 = vpop.f32.mrb[0].mxu0
    %197 = vdwg.mxu0
    %v198 = vmax.f32 %v195, 0.0
    %v199 = vld [vmem:[#allocation4] sm:$0xff]
    %v200 = vld [vmem:[#allocation4 + $0x8] sm:$0xff]
    %v201 = vld [vmem:[#allocation4 + $0x10] sm:$0xff]
    %v202 = vld [vmem:[#allocation4 + $0x18] sm:$0xff]
    %v203 = vld [vmem:[#allocation4 + $0x20] sm:$0xff]
    %v204 = vld [vmem:[#allocation4 + $0x28] sm:$0xff]
    %v205 = vld [vmem:[#allocation4 + $0x30] sm:$0xff]
    %v206 = vld [vmem:[#allocation4 + $0x38] sm:$0xff]
    %v207 = vld [vmem:[#allocation4 + $0x40] sm:$0xff]
    %v208 = vld [vmem:[#allocation4 + $0x48] sm:$0xff]
    %v209 = vld [vmem:[#allocation4 + $0x50] sm:$0xff]
    %v210 = vld [vmem:[#allocation4 + $0x58] sm:$0xff]
    %v211 = vld [vmem:[#allocation4 + $0x60] sm:$0xff]
    %v212 = vld [vmem:[#allocation4 + $0x68] sm:$0xff]
    %v213 = vld [vmem:[#allocation4 + $0x70] sm:$0xff]
    %v214 = vld [vmem:[#allocation4 + $0x78] sm:$0xff]
    %v215 = vld [vmem:[#allocation4 + $0x80] sm:$0xff]
    %v216 = vld [vmem:[#allocation4 + $0x88] sm:$0xff]
    %v217 = vld [vmem:[#allocation4 + $0x90] sm:$0xff]
    %v218 = vld [vmem:[#allocation4 + $0x98] sm:$0xff]
    %v219 = vld [vmem:[#allocation4 + $0xa0] sm:$0xff]
    %v220 = vld [vmem:[#allocation4 + $0xa8] sm:$0xff]
    %v221 = vld [vmem:[#allocation4 + $0xb0] sm:$0xff]
    %v222 = vld [vmem:[#allocation4 + $0xb8] sm:$0xff]
    %v223 = vld [vmem:[#allocation4 + $0xc0] sm:$0xff]
    %v224 = vld [vmem:[#allocation4 + $0xc8] sm:$0xff]
    %v225 = vld [vmem:[#allocation4 + $0xd0] sm:$0xff]
    %v226 = vld [vmem:[#allocation4 + $0xd8] sm:$0xff]
    %v227 = vld [vmem:[#allocation4 + $0xe0] sm:$0xff]
    %v228 = vld [vmem:[#allocation4 + $0xe8] sm:$0xff]
    %v229 = vld [vmem:[#allocation4 + $0xf0] sm:$0xff]
    %v230 = vld [vmem:[#allocation4 + $0xf8] sm:$0xff]
    %v231 = vld [vmem:[%s4] sm:$0x3]
    %v233 = vlaneseq
    %v234 = vshrl.u32 %v233, 7
    %v235 = vsub.s32 0, %v234
    %v236 = vrot.slane %v231, %v235
    %v237 = vlaneseq
    %v238 = vshrl.u32 %v237, 7
    %v239 = vsub.s32 1, %v238
    %v240 = vrot.slane %v231, %v239
    %243 = vmatprep.subr.mxu0 %v200
    %244 = vmatpush1.msra.mxu0 %v199
    %245 = vmatprep.subr.mxu0 %v202
    %246 = vmatpush1.msra.mxu0 %v201
    %247 = vmatprep.subr.mxu0 %v204
    %248 = vmatpush1.msra.mxu0 %v203
    %249 = vmatprep.subr.mxu0 %v206
    %250 = vmatpush1.msra.mxu0 %v205
    %251 = vmatprep.subr.mxu0 %v208
    %252 = vmatpush1.msra.mxu0 %v207
    %253 = vmatprep.subr.mxu0 %v210
    %254 = vmatpush1.msra.mxu0 %v209
    %255 = vmatprep.subr.mxu0 %v212
    %256 = vmatpush1.msra.mxu0 %v211
    %257 = vmatprep.subr.mxu0 %v214
    %258 = vmatpush1.msra.mxu0 %v213
    %259 = vmatprep.subr.mxu0 %v216
    %260 = vmatpush1.msra.mxu0 %v215
    %261 = vmatprep.subr.mxu0 %v218
    %262 = vmatpush1.msra.mxu0 %v217
    %263 = vmatprep.subr.mxu0 %v220
    %264 = vmatpush1.msra.mxu0 %v219
    %265 = vmatprep.subr.mxu0 %v222
    %266 = vmatpush1.msra.mxu0 %v221
    %267 = vmatprep.subr.mxu0 %v224
    %268 = vmatpush1.msra.mxu0 %v223
    %269 = vmatprep.subr.mxu0 %v226
    %270 = vmatpush1.msra.mxu0 %v225
    %271 = vmatprep.subr.mxu0 %v228
    %272 = vmatpush1.msra.mxu0 %v227
    %273 = vmatprep.subr.mxu0 %v230
    %274 = vmatpush1.msra.mxu0 %v229
    %275 = vmatprep.subr.mxu0 0.0
    %276 = vmatpush1.msra.mxu0 0.0
    %277 = vmatprep.subr.mxu0 0.0
    %278 = vmatpush1.msra.mxu0 0.0
    %279 = vmatprep.subr.mxu0 0.0
    %280 = vmatpush1.msra.mxu0 0.0
    %281 = vmatprep.subr.mxu0 0.0
    %282 = vmatpush1.msra.mxu0 0.0
    %283 = vmatprep.subr.mxu0 0.0
    %284 = vmatpush1.msra.mxu0 0.0
    %285 = vmatprep.subr.mxu0 0.0
    %286 = vmatpush1.msra.mxu0 0.0
    %287 = vmatprep.subr.mxu0 0.0
    %288 = vmatpush1.msra.mxu0 0.0
    %289 = vmatprep.subr.mxu0 0.0
    %290 = vmatpush1.msra.mxu0 0.0
    %291 = vmatprep.subr.mxu0 0.0
    %292 = vmatpush1.msra.mxu0 0.0
    %293 = vmatprep.subr.mxu0 0.0
    %294 = vmatpush1.msra.mxu0 0.0
    %295 = vmatprep.subr.mxu0 0.0
    %296 = vmatpush1.msra.mxu0 0.0
    %297 = vmatprep.subr.mxu0 0.0
    %298 = vmatpush1.msra.mxu0 0.0
    %299 = vmatprep.subr.mxu0 0.0
    %300 = vmatpush1.msra.mxu0 0.0
    %301 = vmatprep.subr.mxu0 0.0
    %302 = vmatpush1.msra.mxu0 0.0
    %303 = vmatprep.subr.mxu0 0.0
    %304 = vmatpush1.msra.mxu0 0.0
    %305 = vmatprep.subr.mxu0 0.0
    %306 = vmatpush1.msra.mxu0 0.0
    %307 = vmatprep.mubr.f32.mxu0 0.0
    %308 = vmatmul.mubr.f32.gmra.mrb[0].mxu0 %v198
    %v309 = vpop.f32.mrb[0].mxu0
    %v310 = vadd.f32 %v236, %v309
    %v311 = vpop.f32.mrb[0].mxu0
    %v312 = vadd.f32 %v240, %v311
    %313 = vdwg.mxu0
    %v314 = vmax.f32 %v310, 0.0
    %v315 = vmax.f32 %v312, 0.0
    %v316 = vld [vmem:[#allocation6] sm:$0xff]
    %v317 = vld [vmem:[#allocation6 + $0x8] sm:$0xff]
    %v318 = vld [vmem:[#allocation6 + $0x10] sm:$0xff]
    %v319 = vld [vmem:[#allocation6 + $0x18] sm:$0xff]
    %v320 = vld [vmem:[#allocation6 + $0x20] sm:$0xff]
    %v321 = vld [vmem:[#allocation6 + $0x28] sm:$0xff]
    %v322 = vld [vmem:[#allocation6 + $0x30] sm:$0xff]
    %v323 = vld [vmem:[#allocation6 + $0x38] sm:$0xff]
    %v324 = vld [vmem:[#allocation6 + $0x40] sm:$0xff]
    %v325 = vld [vmem:[#allocation6 + $0x48] sm:$0xff]
    %v326 = vld [vmem:[#allocation6 + $0x50] sm:$0xff]
    %v327 = vld [vmem:[#allocation6 + $0x58] sm:$0xff]
    %v328 = vld [vmem:[#allocation6 + $0x60] sm:$0xff]
    %v329 = vld [vmem:[#allocation6 + $0x68] sm:$0xff]
    %v330 = vld [vmem:[#allocation6 + $0x70] sm:$0xff]
    %v331 = vld [vmem:[#allocation6 + $0x78] sm:$0xff]
    %v332 = vld [vmem:[#allocation6 + $0x80] sm:$0xff]
    %v333 = vld [vmem:[#allocation6 + $0x88] sm:$0xff]
    %v334 = vld [vmem:[#allocation6 + $0x90] sm:$0xff]
    %v335 = vld [vmem:[#allocation6 + $0x98] sm:$0xff]
    %v336 = vld [vmem:[#allocation6 + $0xa0] sm:$0xff]
    %v337 = vld [vmem:[#allocation6 + $0xa8] sm:$0xff]
    %v338 = vld [vmem:[#allocation6 + $0xb0] sm:$0xff]
    %v339 = vld [vmem:[#allocation6 + $0xb8] sm:$0xff]
    %v340 = vld [vmem:[#allocation6 + $0xc0] sm:$0xff]
    %v341 = vld [vmem:[#allocation6 + $0xc8] sm:$0xff]
    %v342 = vld [vmem:[#allocation6 + $0xd0] sm:$0xff]
    %v343 = vld [vmem:[#allocation6 + $0xd8] sm:$0xff]
    %v344 = vld [vmem:[#allocation6 + $0xe0] sm:$0xff]
    %v345 = vld [vmem:[#allocation6 + $0xe8] sm:$0xff]
    %v346 = vld [vmem:[#allocation6 + $0xf0] sm:$0xff]
    %v347 = vld [vmem:[#allocation6 + $0xf8] sm:$0xff]
    %v348 = vld [vmem:[%s6] sm:$0x1]
    %v350 = vlaneseq
    %v351 = vshrl.u32 %v350, 7
    %v352 = vsub.s32 0, %v351
    %v353 = vrot.slane %v348, %v352
    %355 = vmatprep.subr.mxu0 0.0
    %356 = vmatpush1.msra.mxu0 %v316
    %357 = vmatprep.subr.mxu0 0.0
    %358 = vmatpush1.msra.mxu0 %v317
    %359 = vmatprep.subr.mxu0 0.0
    %360 = vmatpush1.msra.mxu0 %v318
    %361 = vmatprep.subr.mxu0 0.0
    %362 = vmatpush1.msra.mxu0 %v319
    %363 = vmatprep.subr.mxu0 0.0
    %364 = vmatpush1.msra.mxu0 %v320
    %365 = vmatprep.subr.mxu0 0.0
    %366 = vmatpush1.msra.mxu0 %v321
    %367 = vmatprep.subr.mxu0 0.0
    %368 = vmatpush1.msra.mxu0 %v322
    %369 = vmatprep.subr.mxu0 0.0
    %370 = vmatpush1.msra.mxu0 %v323
    %371 = vmatprep.subr.mxu0 0.0
    %372 = vmatpush1.msra.mxu0 %v324
    %373 = vmatprep.subr.mxu0 0.0
    %374 = vmatpush1.msra.mxu0 %v325
    %375 = vmatprep.subr.mxu0 0.0
    %376 = vmatpush1.msra.mxu0 %v326
    %377 = vmatprep.subr.mxu0 0.0
    %378 = vmatpush1.msra.mxu0 %v327
    %379 = vmatprep.subr.mxu0 0.0
    %380 = vmatpush1.msra.mxu0 %v328
    %381 = vmatprep.subr.mxu0 0.0
    %382 = vmatpush1.msra.mxu0 %v329
    %383 = vmatprep.subr.mxu0 0.0
    %384 = vmatpush1.msra.mxu0 %v330
    %385 = vmatprep.subr.mxu0 0.0
    %386 = vmatpush1.msra.mxu0 %v331
    %387 = vmatprep.subr.mxu0 0.0
    %388 = vmatpush1.msra.mxu0 %v332
    %389 = vmatprep.subr.mxu0 0.0
    %390 = vmatpush1.msra.mxu0 %v333
    %391 = vmatprep.subr.mxu0 0.0
    %392 = vmatpush1.msra.mxu0 %v334
    %393 = vmatprep.subr.mxu0 0.0
    %394 = vmatpush1.msra.mxu0 %v335
    %395 = vmatprep.subr.mxu0 0.0
    %396 = vmatpush1.msra.mxu0 %v336
    %397 = vmatprep.subr.mxu0 0.0
    %398 = vmatpush1.msra.mxu0 %v337
    %399 = vmatprep.subr.mxu0 0.0
    %400 = vmatpush1.msra.mxu0 %v338
    %401 = vmatprep.subr.mxu0 0.0
    %402 = vmatpush1.msra.mxu0 %v339
    %403 = vmatprep.subr.mxu0 0.0
    %404 = vmatpush1.msra.mxu0 %v340
    %405 = vmatprep.subr.mxu0 0.0
    %406 = vmatpush1.msra.mxu0 %v341
    %407 = vmatprep.subr.mxu0 0.0
    %408 = vmatpush1.msra.mxu0 %v342
    %409 = vmatprep.subr.mxu0 0.0
    %410 = vmatpush1.msra.mxu0 %v343
    %411 = vmatprep.subr.mxu0 0.0
    %412 = vmatpush1.msra.mxu0 %v344
    %413 = vmatprep.subr.mxu0 0.0
    %414 = vmatpush1.msra.mxu0 %v345
    %415 = vmatprep.subr.mxu0 0.0
    %416 = vmatpush1.msra.mxu0 %v346
    %417 = vmatprep.subr.mxu0 0.0
    %418 = vmatpush1.msra.mxu0 %v347
    %419 = vmatprep.mubr.f32.mxu0 %v315
    %420 = vmatmul.mubr.f32.gmra.mrb[0].mxu0 %v314
    %v421 = vpop.f32.mrb[0].mxu0
    %v422 = vadd.f32 %v353, %v421
    %v423 = vpop.f32.mrb[0].mxu0
    %424 = vdwg.mxu0
    %v425 = vmax.f32 %v422, 0.0
    %v426 = vld [vmem:[#allocation7] sm:$0xff]
    %v427 = vld [vmem:[#allocation7 + $0x8] sm:$0xff]
    %v428 = vld [vmem:[#allocation7 + $0x10] sm:$0xff]
    %v429 = vld [vmem:[#allocation7 + $0x18] sm:$0xff]
    %v430 = vld [vmem:[#allocation7 + $0x20] sm:$0xff]
    %v431 = vld [vmem:[#allocation7 + $0x28] sm:$0xff]
    %v432 = vld [vmem:[#allocation7 + $0x30] sm:$0xff]
    %v433 = vld [vmem:[#allocation7 + $0x38] sm:$0xff]
    %v434 = vld [vmem:[#allocation7 + $0x40] sm:$0xff]
    %v435 = vld [vmem:[#allocation7 + $0x48] sm:$0xff]
    %v436 = vld [vmem:[#allocation7 + $0x50] sm:$0xff]
    %v437 = vld [vmem:[#allocation7 + $0x58] sm:$0xff]
    %v438 = vld [vmem:[#allocation7 + $0x60] sm:$0xff]
    %v439 = vld [vmem:[#allocation7 + $0x68] sm:$0xff]
    %v440 = vld [vmem:[#allocation7 + $0x70] sm:$0xff]
    %v441 = vld [vmem:[#allocation7 + $0x78] sm:$0xff]
    %v442 = vld [vmem:[%s8] sm:$0x1]
    %v444 = vlaneseq
    %v445 = vshrl.u32 %v444, 7
    %v446 = vsub.s32 0, %v445
    %v447 = vrot.slane %v442, %v446
    %449 = vmatprep.subr.mxu0 0.0
    %450 = vmatpush1.msra.mxu0 %v426
    %451 = vmatprep.subr.mxu0 0.0
    %452 = vmatpush1.msra.mxu0 %v427
    %453 = vmatprep.subr.mxu0 0.0
    %454 = vmatpush1.msra.mxu0 %v428
    %455 = vmatprep.subr.mxu0 0.0
    %456 = vmatpush1.msra.mxu0 %v429
    %457 = vmatprep.subr.mxu0 0.0
    %458 = vmatpush1.msra.mxu0 %v430
    %459 = vmatprep.subr.mxu0 0.0
    %460 = vmatpush1.msra.mxu0 %v431
    %461 = vmatprep.subr.mxu0 0.0
    %462 = vmatpush1.msra.mxu0 %v432
    %463 = vmatprep.subr.mxu0 0.0
    %464 = vmatpush1.msra.mxu0 %v433
    %465 = vmatprep.subr.mxu0 0.0
    %466 = vmatpush1.msra.mxu0 %v434
    %467 = vmatprep.subr.mxu0 0.0
    %468 = vmatpush1.msra.mxu0 %v435
    %469 = vmatprep.subr.mxu0 0.0
    %470 = vmatpush1.msra.mxu0 %v436
    %471 = vmatprep.subr.mxu0 0.0
    %472 = vmatpush1.msra.mxu0 %v437
    %473 = vmatprep.subr.mxu0 0.0
    %474 = vmatpush1.msra.mxu0 %v438
    %475 = vmatprep.subr.mxu0 0.0
    %476 = vmatpush1.msra.mxu0 %v439
    %477 = vmatprep.subr.mxu0 0.0
    %478 = vmatpush1.msra.mxu0 %v440
    %479 = vmatprep.subr.mxu0 0.0
    %480 = vmatpush1.msra.mxu0 %v441
    %481 = vmatprep.subr.mxu0 0.0
    %482 = vmatpush1.msra.mxu0 0.0
    %483 = vmatprep.subr.mxu0 0.0
    %484 = vmatpush1.msra.mxu0 0.0
    %485 = vmatprep.subr.mxu0 0.0
    %486 = vmatpush1.msra.mxu0 0.0
    %487 = vmatprep.subr.mxu0 0.0
    %488 = vmatpush1.msra.mxu0 0.0
    %489 = vmatprep.subr.mxu0 0.0
    %490 = vmatpush1.msra.mxu0 0.0
    %491 = vmatprep.subr.mxu0 0.0
    %492 = vmatpush1.msra.mxu0 0.0
    %493 = vmatprep.subr.mxu0 0.0
    %494 = vmatpush1.msra.mxu0 0.0
    %495 = vmatprep.subr.mxu0 0.0
    %496 = vmatpush1.msra.mxu0 0.0
    %497 = vmatprep.subr.mxu0 0.0
    %498 = vmatpush1.msra.mxu0 0.0
    %499 = vmatprep.subr.mxu0 0.0
    %500 = vmatpush1.msra.mxu0 0.0
    %501 = vmatprep.subr.mxu0 0.0
    %502 = vmatpush1.msra.mxu0 0.0
    %503 = vmatprep.subr.mxu0 0.0
    %504 = vmatpush1.msra.mxu0 0.0
    %505 = vmatprep.subr.mxu0 0.0
    %506 = vmatpush1.msra.mxu0 0.0
    %507 = vmatprep.subr.mxu0 0.0
    %508 = vmatpush1.msra.mxu0 0.0
    %509 = vmatprep.subr.mxu0 0.0
    %510 = vmatpush1.msra.mxu0 0.0
    %511 = vmatprep.subr.mxu0 0.0
    %512 = vmatpush1.msra.mxu0 0.0
    %513 = vmatprep.mubr.f32.mxu0 0.0
    %514 = vmatmul.mubr.f32.gmra.mrb[0].mxu0 %v425
    %v515 = vpop.f32.mrb[0].mxu0
    %v516 = vadd.f32 %v447, %v515
    %v517 = vpop.f32.mrb[0].mxu0
    %518 = vdwg.mxu0
    %v519 = vlaneseq
    %v520 = vand.u32 %v519, 127
    %vm521 = vcmp.lt.s32.totalorder %v520, 52
    %v522 = vsel %vm521, %v516, -inf
    %523 = vmax.xlane.f32.xlu0 %v522
    %v524 = vpop.xlane.xlu0 %523
    %v525 = vsub.f32 %v522, %v524
    %v526 = vmul.f32 %v525, 1.442695
    %v527 = vpow.pop %v526
    %528 = vadd.xlane.f32.xlu0 %v527
    %v529 = vpop.xlane.xlu0 %528
    %v530 = vrcp.pop %v529
    %v531 = vmul.f32 %v527, %v530
    %vm532 = vcmp.eq.s32.totalorder %v520, 52
    %v533 = vsel %vm532, %v516, 0.0
    %v534 = vadd.f32 %v531, %v533
    %535 = vst [vmem:[%s9] sm:$0xff] %v534
    // Predicated region
    $region54: #{policy_network_forward.1} parent=1 // pred_check
      _
    $region55: #{policy_network_forward.1} parent=1 // pred_check_branch
      %537 = sbr.rel (0) target = $region57
    $region56: #{policy_network_forward.1} parent=1 // pred_region
      _
    $region57: #{policy_network_forward.1} parent=1 // pred_fallthru
      _
    // Predicated region
    $region58: #{policy_network_forward.1} parent=1 // pred_check
      _
    $region59: #{policy_network_forward.1} parent=1 // pred_check_branch
      %539 = sbr.rel (0) target = $region61
    $region60: #{policy_network_forward.1} parent=1 // pred_region
      _
    $region61: #{policy_network_forward.1} parent=1 // pred_fallthru
      _
    %540 = vsyncpa [#allocation3], 1
    %541 = vsyncpa [#allocation5], 1
    %542 = vsyncpa [#allocation8], 1

</llo_original>
